<compile_context>
chip_gen: v5e
topology: v5e:2x2
jax: 0.10.0
libtpu: 0.0.40
codegen_flags: <defaults>
</compile_context>

<pallas_src>
import functools
import math

import jax
import jax.numpy as jnp
from jax.experimental import pallas as pl
from jax.experimental.pallas import tpu as pltpu

IN_DIM = 4
HIDDEN = 100
OUT_DIM = 3
LANE = 128     # lane width for the hidden layers
OUT_PAD = 8    # narrow padded output width (>= OUT_DIM); kernel writes only this


def _round_up(n, m):
    return ((n + m - 1) // m) * m


def _cdiv(a, b):
    return (a + b - 1) // b


def mlp_kernel(x_ref, w1_ref, b1_ref, w2_ref, b2_ref, w3_ref, b3_ref, o_ref):
    # x: (tb, 4) f32 ; w1: (4, 128) ; w2: (128, 128) ; w3: (128, 8) ;
    # b1/b2: (1, 128) ; b3: (1, 8).  Everything f32.
    x = x_ref[...]

    # ---- Layer 1: Linear(4 -> 128-padded) on the VPU (K=4 would waste an MXU pass).
    w1 = w1_ref[...]
    acc1 = x[:, 0:1] * w1[0:1, :] + b1_ref[...]
    for k in range(1, IN_DIM):  # static unroll, 3 more broadcast FMAs
        acc1 = acc1 + x[:, k:k + 1] * w1[k:k + 1, :]
    h1 = jnp.maximum(acc1, 0.0)

    # ---- Layer 2: Linear(128 -> 128) on the MXU, f32 operands, f32 accumulation.
    h2 = jnp.dot(h1, w2_ref[...], preferred_element_type=jnp.float32) + b2_ref[...]
    h2 = jnp.maximum(h2, 0.0)

    # ---- Layer 3: Linear(128 -> 8-padded) on the MXU; real output cols are [:3].
    out = jnp.dot(h2, w3_ref[...], preferred_element_type=jnp.float32) + b3_ref[...]
    o_ref[...] = out.astype(o_ref.dtype)


def prepare_params(params):
    """Zero-pad feature dims (hidden -> 128 lanes, output -> OUT_PAD). All f32."""
    w1, b1, w2, b2, w3, b3 = params
    w1p = jnp.zeros((IN_DIM, LANE), jnp.float32).at[:, :HIDDEN].set(w1)
    b1p = jnp.zeros((1, LANE), jnp.float32).at[:, :HIDDEN].set(b1.reshape(1, -1))
    w2p = jnp.zeros((LANE, LANE), jnp.float32).at[:HIDDEN, :HIDDEN].set(w2)
    b2p = jnp.zeros((1, LANE), jnp.float32).at[:, :HIDDEN].set(b2.reshape(1, -1))
    w3p = jnp.zeros((LANE, OUT_PAD), jnp.float32).at[:HIDDEN, :OUT_DIM].set(w3)
    b3p = jnp.zeros((1, OUT_PAD), jnp.float32).at[:, :OUT_DIM].set(b3.reshape(1, -1))
    return w1p, b1p, w2p, b2p, w3p, b3p


@functools.partial(jax.jit, static_argnames=("tile_b",))
def multiclass_classification(x, padded_params, tile_b=2048):
    w1p, b1p, w2p, b2p, w3p, b3p = padded_params
    batch = x.shape[0]

    # Batch tile: multiple of 8 (sublane), capped at tile_b, and chosen so the grid
    # has >= 2 steps whenever the batch allows (v7x megacore sharding of "parallel").
    tb = min(tile_b, _round_up(max(_cdiv(batch, 2), 8), 8))
    b_pad = _round_up(batch, tb)
    if b_pad != batch:
        x = jnp.pad(x, ((0, b_pad - batch), (0, 0)))

    const = lambda i: (0, 0)  # weights/biases: same block every step -> VMEM-resident

    out_padded = pl.pallas_call(
        mlp_kernel,
        out_shape=jax.ShapeDtypeStruct((b_pad, OUT_PAD), jnp.float32),
        grid=(b_pad // tb,),
        in_specs=[
            pl.BlockSpec((tb, IN_DIM), lambda i: (i, 0)),   # x tile (last dim == full dim 4)
            pl.BlockSpec((IN_DIM, LANE), const),            # w1
            pl.BlockSpec((1, LANE), const),                 # b1
            pl.BlockSpec((LANE, LANE), const),              # w2
            pl.BlockSpec((1, LANE), const),                 # b2
            pl.BlockSpec((LANE, OUT_PAD), const),           # w3 (narrow)
            pl.BlockSpec((1, OUT_PAD), const),              # b3 (narrow)
        ],
        out_specs=pl.BlockSpec((tb, OUT_PAD), lambda i: (i, 0)),  # narrow output tile
        compiler_params=pltpu.CompilerParams(
            dimension_semantics=("parallel",),
            vmem_limit_bytes=48 * 1024 * 1024),
    )(x, w1p, b1p, w2p, b2p, w3p, b3p)

    # Only a cheap slice of the narrow (b_pad, 8) slab remains (row de-pad + 3 cols).
    return out_padded[:batch, :OUT_DIM]


def init_linear(key, fan_in, fan_out):
    """Deterministic init mimicking nn.Linear defaults (Kaiming-uniform weights,
    uniform bias in [-1/sqrt(fan_in), 1/sqrt(fan_in)]). Weights stored [fan_in, fan_out]."""
    kw, kb = jax.random.split(key)
    bound_w = math.sqrt(1.0 / fan_in) * math.sqrt(3.0)  # kaiming_uniform(a=sqrt(5))
    bound_b = 1.0 / math.sqrt(fan_in)
    w = jax.random.uniform(kw, (fan_in, fan_out), jnp.float32, -bound_w, bound_w)
    b = jax.random.uniform(kb, (fan_out,), jnp.float32, -bound_b, bound_b)
    return w, b


def ref_forward(x, params):
    w1, b1, w2, b2, w3, b3 = params
    h1 = jnp.maximum(x @ w1 + b1, 0.0)
    h2 = jnp.maximum(h1 @ w2 + b2, 0.0)
    return h2 @ w3 + b3


if __name__ == "__main__":
    key = jax.random.PRNGKey(0)
    k_x, k1, k2, k3 = jax.random.split(key, 4)

    w1, b1 = init_linear(k1, IN_DIM, HIDDEN)
    w2, b2 = init_linear(k2, HIDDEN, HIDDEN)
    w3, b3 = init_linear(k3, HIDDEN, OUT_DIM)
    params = (w1, b1, w2, b2, w3, b3)
    padded = prepare_params(params)

    # Small-batch run (single grid step), same shapes the module implies.
    x_small = jax.random.normal(k_x, (8, IN_DIM), jnp.float32)
    out_small = jax.block_until_ready(multiclass_classification(x_small, padded))
    ref_small = ref_forward(x_small, params)
    assert out_small.shape == (8, OUT_DIM)
    assert jnp.allclose(out_small, ref_small, atol=5e-2, rtol=1e-2), (
        float(jnp.max(jnp.abs(out_small - ref_small))))

    # Larger run exercising the multi-step batch grid (>=2 steps), padding, pipelining.
    x_big = jax.random.normal(k_x, (300, IN_DIM), jnp.float32)
    out_big = jax.block_until_ready(multiclass_classification(x_big, padded))
    ref_big = ref_forward(x_big, params)
    assert out_big.shape == (300, OUT_DIM)
    assert jnp.allclose(out_big, ref_big, atol=5e-2, rtol=1e-2), (
        float(jnp.max(jnp.abs(out_big - ref_big))))

    print("KERNEL_OK")
</pallas_src>

<mosaic_0001>
module attributes {stable_mosaic.version = 11 : i64} {
  func.func @mlp_kernel(%arg0: i32, %arg1: memref<8x4xf32, #tpu.memory_space<vmem>>, %arg2: memref<4x128xf32, #tpu.memory_space<vmem>>, %arg3: memref<1x128xf32, #tpu.memory_space<vmem>>, %arg4: memref<128x128xf32, #tpu.memory_space<vmem>>, %arg5: memref<1x128xf32, #tpu.memory_space<vmem>>, %arg6: memref<128x8xf32, #tpu.memory_space<vmem>>, %arg7: memref<1x8xf32, #tpu.memory_space<vmem>>, %arg8: memref<8x8xf32, #tpu.memory_space<vmem>>) attributes {dimension_semantics = [#tpu.dimension_semantics<parallel>], iteration_bounds = array<i64: 1>, scalar_prefetch = 0 : i64, scratch_operands = 0 : i64, tpu.core_type = #tpu.core_type<tc>, window_params = [{transform_indices = @transform_0, window_bounds = array<i64: 8, 4>}, {pipeline_mode = #tpu.pipeline_mode<synchronous>, transform_indices = @transform_1, window_bounds = array<i64: 4, 128>}, {pipeline_mode = #tpu.pipeline_mode<synchronous>, transform_indices = @transform_2, window_bounds = array<i64: 1, 128>}, {pipeline_mode = #tpu.pipeline_mode<synchronous>, transform_indices = @transform_3, window_bounds = array<i64: 128, 128>}, {pipeline_mode = #tpu.pipeline_mode<synchronous>, transform_indices = @transform_4, window_bounds = array<i64: 1, 128>}, {pipeline_mode = #tpu.pipeline_mode<synchronous>, transform_indices = @transform_5, window_bounds = array<i64: 128, 8>}, {pipeline_mode = #tpu.pipeline_mode<synchronous>, transform_indices = @transform_6, window_bounds = array<i64: 1, 8>}, {transform_indices = @transform_7, window_bounds = array<i64: 8, 8>}]} {
    %c0 = arith.constant 0 : index
    %c0_0 = arith.constant 0 : index
    %0 = vector.load %arg1[%c0, %c0_0] : memref<8x4xf32, #tpu.memory_space<vmem>>, vector<8x4xf32>
    %c0_1 = arith.constant 0 : index
    %c0_2 = arith.constant 0 : index
    %1 = vector.load %arg2[%c0_1, %c0_2] : memref<4x128xf32, #tpu.memory_space<vmem>>, vector<4x128xf32>
    %2 = vector.extract_strided_slice %0 {offsets = [0, 0], sizes = [8, 1], strides = [1, 1]} : vector<8x4xf32> to vector<8x1xf32>
    %3 = vector.extract_strided_slice %1 {offsets = [0, 0], sizes = [1, 128], strides = [1, 1]} : vector<4x128xf32> to vector<1x128xf32>
    %4 = vector.broadcast %2 : vector<8x1xf32> to vector<8x128xf32>
    %5 = vector.broadcast %3 : vector<1x128xf32> to vector<8x128xf32>
    %6 = arith.mulf %4, %5 : vector<8x128xf32>
    %c0_3 = arith.constant 0 : index
    %c0_4 = arith.constant 0 : index
    %7 = vector.load %arg3[%c0_3, %c0_4] : memref<1x128xf32, #tpu.memory_space<vmem>>, vector<1x128xf32>
    %8 = vector.broadcast %7 : vector<1x128xf32> to vector<8x128xf32>
    %9 = arith.addf %6, %8 : vector<8x128xf32>
    %10 = vector.extract_strided_slice %0 {offsets = [0, 1], sizes = [8, 1], strides = [1, 1]} : vector<8x4xf32> to vector<8x1xf32>
    %11 = vector.extract_strided_slice %1 {offsets = [1, 0], sizes = [1, 128], strides = [1, 1]} : vector<4x128xf32> to vector<1x128xf32>
    %12 = vector.broadcast %10 : vector<8x1xf32> to vector<8x128xf32>
    %13 = vector.broadcast %11 : vector<1x128xf32> to vector<8x128xf32>
    %14 = arith.mulf %12, %13 : vector<8x128xf32>
    %15 = arith.addf %9, %14 : vector<8x128xf32>
    %16 = vector.extract_strided_slice %0 {offsets = [0, 2], sizes = [8, 1], strides = [1, 1]} : vector<8x4xf32> to vector<8x1xf32>
    %17 = vector.extract_strided_slice %1 {offsets = [2, 0], sizes = [1, 128], strides = [1, 1]} : vector<4x128xf32> to vector<1x128xf32>
    %18 = vector.broadcast %16 : vector<8x1xf32> to vector<8x128xf32>
    %19 = vector.broadcast %17 : vector<1x128xf32> to vector<8x128xf32>
    %20 = arith.mulf %18, %19 : vector<8x128xf32>
    %21 = arith.addf %15, %20 : vector<8x128xf32>
    %22 = vector.extract_strided_slice %0 {offsets = [0, 3], sizes = [8, 1], strides = [1, 1]} : vector<8x4xf32> to vector<8x1xf32>
    %23 = vector.extract_strided_slice %1 {offsets = [3, 0], sizes = [1, 128], strides = [1, 1]} : vector<4x128xf32> to vector<1x128xf32>
    %24 = vector.broadcast %22 : vector<8x1xf32> to vector<8x128xf32>
    %25 = vector.broadcast %23 : vector<1x128xf32> to vector<8x128xf32>
    %26 = arith.mulf %24, %25 : vector<8x128xf32>
    %27 = arith.addf %21, %26 : vector<8x128xf32>
    %cst = arith.constant 0.000000e+00 : f32
    %28 = vector.broadcast %cst : f32 to vector<8x128xf32>
    %29 = arith.maximumf %27, %28 : vector<8x128xf32>
    %c0_5 = arith.constant 0 : index
    %c0_6 = arith.constant 0 : index
    %30 = vector.load %arg4[%c0_5, %c0_6] : memref<128x128xf32, #tpu.memory_space<vmem>>, vector<128x128xf32>
    %cst_7 = arith.constant dense<0.000000e+00> : vector<8x128xf32>
    %31 = tpu.matmul %29, %30, %cst_7 {dimension_numbers = #tpu.dot_dimension_numbers<[1], [0], [0], [1], [0, 0, 1, 1], [], []>} : vector<8x128xf32>, vector<128x128xf32>, vector<8x128xf32> -> vector<8x128xf32>
    %c0_8 = arith.constant 0 : index
    %c0_9 = arith.constant 0 : index
    %32 = vector.load %arg5[%c0_8, %c0_9] : memref<1x128xf32, #tpu.memory_space<vmem>>, vector<1x128xf32>
    %33 = vector.broadcast %32 : vector<1x128xf32> to vector<8x128xf32>
    %34 = arith.addf %31, %33 : vector<8x128xf32>
    %cst_10 = arith.constant 0.000000e+00 : f32
    %35 = vector.broadcast %cst_10 : f32 to vector<8x128xf32>
    %36 = arith.maximumf %34, %35 : vector<8x128xf32>
    %c0_11 = arith.constant 0 : index
    %c0_12 = arith.constant 0 : index
    %37 = vector.load %arg6[%c0_11, %c0_12] : memref<128x8xf32, #tpu.memory_space<vmem>>, vector<128x8xf32>
    %cst_13 = arith.constant dense<0.000000e+00> : vector<8x8xf32>
    %38 = tpu.matmul %36, %37, %cst_13 {dimension_numbers = #tpu.dot_dimension_numbers<[1], [0], [0], [1], [0, 0, 1, 1], [], []>} : vector<8x128xf32>, vector<128x8xf32>, vector<8x8xf32> -> vector<8x8xf32>
    %c0_14 = arith.constant 0 : index
    %c0_15 = arith.constant 0 : index
    %39 = vector.load %arg7[%c0_14, %c0_15] : memref<1x8xf32, #tpu.memory_space<vmem>>, vector<1x8xf32>
    %40 = vector.broadcast %39 : vector<1x8xf32> to vector<8x8xf32>
    %41 = arith.addf %38, %40 : vector<8x8xf32>
    %c0_16 = arith.constant 0 : index
    %c0_17 = arith.constant 0 : index
    %42 = vector.load %arg8[%c0_16, %c0_17] : memref<8x8xf32, #tpu.memory_space<vmem>>, vector<8x8xf32>
    tpu.vector_store %arg8[%c0_16, %c0_17], %41 {strides = array<i32>} : memref<8x8xf32, #tpu.memory_space<vmem>>, vector<8x8xf32>,
    return
  }
  func.func @transform_0(%arg0: i32) -> (i32, i32) {
    %c0_i32 = arith.constant 0 : i32
    %c0_i32_0 = arith.constant 0 : i32
    return %arg0, %c0_i32 : i32, i32
  }
  func.func @transform_1(%arg0: i32) -> (i32, i32) {
    %c0_i32 = arith.constant 0 : i32
    %c0_i32_0 = arith.constant 0 : i32
    %c0_i32_1 = arith.constant 0 : i32
    return %c0_i32, %c0_i32_0 : i32, i32
  }
  func.func @transform_2(%arg0: i32) -> (i32, i32) {
    %c0_i32 = arith.constant 0 : i32
    %c0_i32_0 = arith.constant 0 : i32
    %c0_i32_1 = arith.constant 0 : i32
    return %c0_i32, %c0_i32_0 : i32, i32
  }
  func.func @transform_3(%arg0: i32) -> (i32, i32) {
    %c0_i32 = arith.constant 0 : i32
    %c0_i32_0 = arith.constant 0 : i32
    %c0_i32_1 = arith.constant 0 : i32
    return %c0_i32, %c0_i32_0 : i32, i32
  }
  func.func @transform_4(%arg0: i32) -> (i32, i32) {
    %c0_i32 = arith.constant 0 : i32
    %c0_i32_0 = arith.constant 0 : i32
    %c0_i32_1 = arith.constant 0 : i32
    return %c0_i32, %c0_i32_0 : i32, i32
  }
  func.func @transform_5(%arg0: i32) -> (i32, i32) {
    %c0_i32 = arith.constant 0 : i32
    %c0_i32_0 = arith.constant 0 : i32
    %c0_i32_1 = arith.constant 0 : i32
    return %c0_i32, %c0_i32_0 : i32, i32
  }
  func.func @transform_6(%arg0: i32) -> (i32, i32) {
    %c0_i32 = arith.constant 0 : i32
    %c0_i32_0 = arith.constant 0 : i32
    %c0_i32_1 = arith.constant 0 : i32
    return %c0_i32, %c0_i32_0 : i32, i32
  }
  func.func @transform_7(%arg0: i32) -> (i32, i32) {
    %c0_i32 = arith.constant 0 : i32
    %c0_i32_0 = arith.constant 0 : i32
    return %arg0, %c0_i32 : i32, i32
  }
}

</mosaic_0001>

<llo_original>
// kernel: multiclass_classification.1
$region0: #{multiclass_classification.1}
  #allocation0 [shape = 'u32[]', space=smem, size = 0x4, offset = 0x4, fixed_abs, tag = 'smem constant byte address 0x4 - core index']
  #allocation1 [shape = 'u32[72,128]{1,0:T(1,128)}', space=vmem, size = 0x9000, scoped, tag = 'internal scratch']
  %s0 = inlined_call_operand.vmem [shape: f32[8,4], index: 0, kind: input, shape index: {}]
  %s1 = inlined_call_operand.vmem [shape: f32[4,128], index: 1, kind: input, shape index: {}]
  %s2 = inlined_call_operand.vmem [shape: f32[1,128], index: 2, kind: input, shape index: {}]
  %s3 = inlined_call_operand.vmem [shape: f32[128,128], index: 3, kind: input, shape index: {}]
  %s4 = inlined_call_operand.vmem [shape: f32[1,128], index: 4, kind: input, shape index: {}]
  %s5 = inlined_call_operand.vmem [shape: f32[128,8], index: 5, kind: input, shape index: {}]
  %s6 = inlined_call_operand.vmem [shape: f32[1,8], index: 6, kind: input, shape index: {}]
  %s7 = inlined_call_operand.vmem [shape: f32[8,8], index: 7, kind: output, shape index: {}]
  %s8 = sld [smem:[#allocation0]]
  $region38: #{multiclass_classification.1} parent=0
    _
  %s10 = ssub.s32 1, %s8
  %s11 = scalar_select 0, %s10, %s8
  // Predicated region
  $region2: #{multiclass_classification.1} parent=0 // pred_check
    _
  $region3: #{multiclass_classification.1} parent=0 // pred_check_branch
    %13 = sbr.rel (0) target = $region5
  $region4: #{multiclass_classification.1} parent=0 // pred_region
    _
  $region5: #{multiclass_classification.1} parent=0 // pred_fallthru
    _
  // Predicated region
  $region6: #{multiclass_classification.1} parent=0 // pred_check
    _
  $region7: #{multiclass_classification.1} parent=0 // pred_check_branch
    %15 = sbr.rel (0) target = $region9
  $region8: #{multiclass_classification.1} parent=0 // pred_region
    _
  $region9: #{multiclass_classification.1} parent=0 // pred_fallthru
    _
  // Predicated region
  $region10: #{multiclass_classification.1} parent=0 // pred_check
    _
  $region11: #{multiclass_classification.1} parent=0 // pred_check_branch
    %17 = sbr.rel (0) target = $region13
  $region12: #{multiclass_classification.1} parent=0 // pred_region
    _
  $region13: #{multiclass_classification.1} parent=0 // pred_fallthru
    _
  // Predicated region
  $region14: #{multiclass_classification.1} parent=0 // pred_check
    _
  $region15: #{multiclass_classification.1} parent=0 // pred_check_branch
    %19 = sbr.rel (0) target = $region17
  $region16: #{multiclass_classification.1} parent=0 // pred_region
    _
  $region17: #{multiclass_classification.1} parent=0 // pred_fallthru
    _
  // Predicated region
  $region18: #{multiclass_classification.1} parent=0 // pred_check
    _
  $region19: #{multiclass_classification.1} parent=0 // pred_check_branch
    %21 = sbr.rel (0) target = $region21
  $region20: #{multiclass_classification.1} parent=0 // pred_region
    _
  $region21: #{multiclass_classification.1} parent=0 // pred_fallthru
    _
  // Predicated region
  $region22: #{multiclass_classification.1} parent=0 // pred_check
    _
  $region23: #{multiclass_classification.1} parent=0 // pred_check_branch
    %23 = sbr.rel (0) target = $region25
  $region24: #{multiclass_classification.1} parent=0 // pred_region
    _
  $region25: #{multiclass_classification.1} parent=0 // pred_fallthru
    _
  // Predicated region
  $region26: #{multiclass_classification.1} parent=0 // pred_check
    _
  $region27: #{multiclass_classification.1} parent=0 // pred_check_branch
    %25 = sbr.rel (0) target = $region29
  $region28: #{multiclass_classification.1} parent=0 // pred_region
    _
  $region29: #{multiclass_classification.1} parent=0 // pred_fallthru
    _
  %v26 = vld [vmem:[%s0] sm:$0xff]
  %v27 = vld [vmem:[%s1] sm:$0xf]
  %29 = vset.pattern.permute.xlu0 0
  %30 = vperm.xlu0 %29, %v26
  %v31 = vpop.permute.xlu0 %30
  %v33 = vperm.slane %v27, 0
  %v34 = vmul.f32 %v31, %v33
  %v35 = vld [vmem:[%s2] sm:$0x1]
  %v37 = vperm.slane %v35, 0
  %v39 = vadd.f32 %v34, %v37
  %40 = vset.pattern.permute.xlu0 1
  %41 = vperm.xlu0 %40, %v26
  %v42 = vpop.permute.xlu0 %41
  %v44 = vperm.slane %v27, 1
  %v45 = vmul.f32 %v42, %v44
  %v46 = vadd.f32 %v39, %v45
  %47 = vset.pattern.permute.xlu0 2
  %48 = vperm.xlu0 %47, %v26
  %v49 = vpop.permute.xlu0 %48
  %v51 = vperm.slane %v27, 2
  %v52 = vmul.f32 %v49, %v51
  %v53 = vadd.f32 %v46, %v52
  %54 = vset.pattern.permute.xlu0 3
  %55 = vperm.xlu0 %54, %v26
  %v56 = vpop.permute.xlu0 %55
  %v58 = vperm.slane %v27, 3
  %v59 = vmul.f32 %v56, %v58
  %v60 = vadd.f32 %v53, %v59
  %v61 = vmax.f32 %v60, 0.0
  %v62 = vld [vmem:[%s3] sm:$0xff]
  %v63 = vld [vmem:[%s3 + $0x8] sm:$0xff]
  %v64 = vld [vmem:[%s3 + $0x10] sm:$0xff]
  %v65 = vld [vmem:[%s3 + $0x18] sm:$0xff]
  %v66 = vld [vmem:[%s3 + $0x20] sm:$0xff]
  %v67 = vld [vmem:[%s3 + $0x28] sm:$0xff]
  %v68 = vld [vmem:[%s3 + $0x30] sm:$0xff]
  %v69 = vld [vmem:[%s3 + $0x38] sm:$0xff]
  %v70 = vld [vmem:[%s3 + $0x40] sm:$0xff]
  %v71 = vld [vmem:[%s3 + $0x48] sm:$0xff]
  %v72 = vld [vmem:[%s3 + $0x50] sm:$0xff]
  %v73 = vld [vmem:[%s3 + $0x58] sm:$0xff]
  %v74 = vld [vmem:[%s3 + $0x60] sm:$0xff]
  %v75 = vld [vmem:[%s3 + $0x68] sm:$0xff]
  %v76 = vld [vmem:[%s3 + $0x70] sm:$0xff]
  %v77 = vld [vmem:[%s3 + $0x78] sm:$0xff]
  %v78 = vld [vmem:[%s4] sm:$0x1]
  %v80 = vperm.slane %v78, 0
  %82 = vmatpush.msra.mxu0 %v77
  %83 = vmatpush.msra.mxu0 %v76
  %84 = vmatpush.msra.mxu0 %v75
  %85 = vmatpush.msra.mxu0 %v74
  %86 = vmatpush.msra.mxu0 %v73
  %87 = vmatpush.msra.mxu0 %v72
  %88 = vmatpush.msra.mxu0 %v71
  %89 = vmatpush.msra.mxu0 %v70
  %90 = vmatpush.msra.mxu0 %v69
  %91 = vmatpush.msra.mxu0 %v68
  %92 = vmatpush.msra.mxu0 %v67
  %93 = vmatpush.msra.mxu0 %v66
  %94 = vmatpush.msra.mxu0 %v65
  %95 = vmatpush.msra.mxu0 %v64
  %96 = vmatpush.msra.mxu0 %v63
  %97 = vmatpush.msra.mxu0 %v62
  %98 = vmatmul.f32.gmra.mxu0 %v61
  %v99 = vpop.f32.mrf.mxu0
  %v100 = vadd.f32 %v80, %v99
  %101 = vdwg.mxu0
  %v102 = vmax.f32 %v100, 0.0
  %v103 = vld [vmem:[%s5] sm:$0xff]
  %v104 = vld [vmem:[%s5 + $0x8] sm:$0xff]
  %v105 = vld [vmem:[%s5 + $0x10] sm:$0xff]
  %v106 = vld [vmem:[%s5 + $0x18] sm:$0xff]
  %v107 = vld [vmem:[%s5 + $0x20] sm:$0xff]
  %v108 = vld [vmem:[%s5 + $0x28] sm:$0xff]
  %v109 = vld [vmem:[%s5 + $0x30] sm:$0xff]
  %v110 = vld [vmem:[%s5 + $0x38] sm:$0xff]
  %v111 = vld [vmem:[%s5 + $0x40] sm:$0xff]
  %v112 = vld [vmem:[%s5 + $0x48] sm:$0xff]
  %v113 = vld [vmem:[%s5 + $0x50] sm:$0xff]
  %v114 = vld [vmem:[%s5 + $0x58] sm:$0xff]
  %v115 = vld [vmem:[%s5 + $0x60] sm:$0xff]
  %v116 = vld [vmem:[%s5 + $0x68] sm:$0xff]
  %v117 = vld [vmem:[%s5 + $0x70] sm:$0xff]
  %v118 = vld [vmem:[%s5 + $0x78] sm:$0xff]
  %v119 = vld [vmem:[%s6] sm:$0x1]
  %v121 = vperm.slane %v119, 0
  %123 = vmatpush.msra.mxu0 %v118
  %124 = vmatpush.msra.mxu0 %v117
  %125 = vmatpush.msra.mxu0 %v116
  %126 = vmatpush.msra.mxu0 %v115
  %127 = vmatpush.msra.mxu0 %v114
  %128 = vmatpush.msra.mxu0 %v113
  %129 = vmatpush.msra.mxu0 %v112
  %130 = vmatpush.msra.mxu0 %v111
  %131 = vmatpush.msra.mxu0 %v110
  %132 = vmatpush.msra.mxu0 %v109
  %133 = vmatpush.msra.mxu0 %v108
  %134 = vmatpush.msra.mxu0 %v107
  %135 = vmatpush.msra.mxu0 %v106
  %136 = vmatpush.msra.mxu0 %v105
  %137 = vmatpush.msra.mxu0 %v104
  %138 = vmatpush.msra.mxu0 %v103
  %139 = vmatmul.f32.gmra.mxu0 %v102
  %v140 = vpop.f32.mrf.mxu0
  %v141 = vadd.f32 %v121, %v140
  %142 = vdwg.mxu0
  %vm143 = vcmask 64512
  %144 = vst.msk [vmem:[%s7] sm:$0xff] %vm143, %v141
  // Predicated region
  $region30: #{multiclass_classification.1} parent=0 // pred_check
    _
  $region31: #{multiclass_classification.1} parent=0 // pred_check_branch
    %146 = sbr.rel (0) target = $region33
  $region32: #{multiclass_classification.1} parent=0 // pred_region
    _
  $region33: #{multiclass_classification.1} parent=0 // pred_fallthru
    _
  // Predicated region
  $region34: #{multiclass_classification.1} parent=0 // pred_check
    _
  $region35: #{multiclass_classification.1} parent=0 // pred_check_branch
    %148 = sbr.rel (0) target = $region37
  $region36: #{multiclass_classification.1} parent=0 // pred_region
    _
  $region37: #{multiclass_classification.1} parent=0 // pred_fallthru
    _

</llo_original>
